<compile_context>
chip_gen: v7x
topology: tpu7x:2x2x1
jax: 0.10.0
libtpu: 0.0.40
codegen_flags: <defaults>
</compile_context>

<pallas_src>
import functools

import jax
import jax.numpy as jnp
from jax.experimental import pallas as pl
from jax.experimental.pallas import tpu as pltpu


# ------------------------------------------------------------------
# Kernel: fused ReLU + per-(b, c) global spatial max + min suppression.
# x_ref / o_ref blocks are (tm, H*W); each row is one (b, c) feature map.
# ------------------------------------------------------------------
def _drs_kernel(x_ref, o_ref, *, delta):
    # relu(x)              == clip(x, 0, inf)
    # max over relu(x)     == max(max(x), 0)
    # min(relu(x), cap)    == clip(x, 0, cap)     (cap = max * delta >= 0)
    # Computing straight from x avoids keeping a relu'd full tile live across
    # the XLU reduction (less vreg/VMEM pressure -> larger tiles fit).
    x = x_ref[...]
    cap = jnp.maximum(jnp.max(x, axis=-1, keepdims=True), 0.0) * delta
    o_ref[...] = jnp.clip(x, 0.0, cap)


def _pick_row_tile(rows, hw, itemsize, target_bytes):
    """Pick the sublane (row) tile size for a (tm, hw) block.

    - dtype-aware sublane multiple (8 f32 / 16 bf16 / 32 int8-fp8)
    - targets `target_bytes` per block so each DMA is large enough to sit
      near the HBM roofline
    - no divisibility requirement on `rows`: the grid uses pl.cdiv and the
      ragged last block is masked (row-wise reduction => padded rows cannot
      corrupt valid rows).
    """
    sub = max(8, 32 // max(1, itemsize))      # rows per packed sublane group
    if rows <= sub:
        return rows                           # single full block (always legal)
    row_bytes = max(1, hw * itemsize)
    tm = (target_bytes // row_bytes) // sub * sub
    tm = max(sub, tm)
    if tm >= rows:
        return rows                           # whole array in one block
    # Prefer an even number of grid steps so v7x's two TensorCores both get
    # work when the row axis is sharded via dimension_semantics="parallel".
    n = pl.cdiv(rows, tm)
    if n > 1 and n % 2:
        tm_even = -(-pl.cdiv(rows, n + 1) // sub) * sub
        if sub <= tm_even <= tm:
            tm = tm_even
    return tm


def drs_forward(x_nchw, delta, *, target_tile_bytes=4 << 20, donate_input=False):
    """DRS non-learnable: min(relu(x), global_max_hw(relu(x)) * delta)."""
    B, C, H, W = x_nchw.shape
    rows, hw = B * C, H * W
    x2 = x_nchw.reshape(rows, hw)             # lane-dense view: spatial -> lanes
    itemsize = x2.dtype.itemsize

    tm = _pick_row_tile(rows, hw, itemsize, target_tile_bytes)
    grid = (pl.cdiv(rows, tm),)               # ragged last block is masked

    # BlockSpec double-buffers both the input and the output block, plus some
    # body headroom => budget ~6x one tile explicitly, so large tiles neither
    # trip v5e's 16 MiB scoped default nor exceed v7x's 64 MiB physical VMEM.
    tile_bytes = tm * hw * itemsize
    vmem_limit = int(min(48 << 20, max(16 << 20, 6 * tile_bytes)))

    out = pl.pallas_call(
        functools.partial(_drs_kernel, delta=float(delta)),
        out_shape=jax.ShapeDtypeStruct((rows, hw), x2.dtype),
        grid=grid,
        in_specs=[pl.BlockSpec((tm, hw), lambda i: (i, 0))],
        out_specs=pl.BlockSpec((tm, hw), lambda i: (i, 0)),
        compiler_params=pltpu.CompilerParams(
            dimension_semantics=("parallel",),
            vmem_limit_bytes=vmem_limit),
        # Optional in-place update when the caller no longer needs x.
        input_output_aliases=({0: 0} if donate_input else {}),
    )(x2)
    return out.reshape(B, C, H, W)


if __name__ == "__main__":
    delta = 0.55                              # DRS suppression hyperparameter

    def ref_drs(x, d):
        xr = jnp.maximum(x, 0.0)
        x_max = jnp.max(xr, axis=(2, 3), keepdims=True)
        return jnp.minimum(xr, x_max * d)

    # Small NCHW input consistent with the DRS module.
    B, C, H, W = 2, 4, 16, 16
    x = jax.random.normal(jax.random.PRNGKey(0), (B, C, H, W), jnp.float32)

    fwd = jax.jit(functools.partial(drs_forward, delta=delta))
    y = fwd(x)
    jax.block_until_ready(y)
    assert y.shape == x.shape
    assert bool(jnp.all(jnp.isfinite(y)))
    assert bool(jnp.allclose(y, ref_drs(x, delta), atol=1e-6, rtol=1e-6))

    # Second check: ragged row count + forced multi-step grid to exercise the
    # cdiv-masked tiling path (tiny target tile used only for this test).
    B2, C2, H2, W2 = 3, 20, 16, 16            # rows = 60 (not a tile multiple)
    x_b = jax.random.normal(jax.random.PRNGKey(1), (B2, C2, H2, W2), jnp.float32)
    y_b = jax.jit(functools.partial(drs_forward, delta=delta,
                                    target_tile_bytes=16 * 1024))(x_b)
    jax.block_until_ready(y_b)
    assert bool(jnp.allclose(y_b, ref_drs(x_b, delta), atol=1e-6, rtol=1e-6))

    print("KERNEL_OK")
</pallas_src>

<mosaic_0001>
module attributes {stable_mosaic.version = 11 : i64} {
  func.func @_drs_kernel(%arg0: i32, %arg1: memref<8x256xf32, #tpu.memory_space<vmem>>, %arg2: memref<8x256xf32, #tpu.memory_space<vmem>>) attributes {dimension_semantics = [#tpu.dimension_semantics<parallel>], iteration_bounds = array<i64: 1>, scalar_prefetch = 0 : i64, scratch_operands = 0 : i64, tpu.core_type = #tpu.core_type<tc>, window_params = [{transform_indices = @transform_0, window_bounds = array<i64: 8, 256>}, {transform_indices = @transform_1, window_bounds = array<i64: 8, 256>}]} {
    %c0 = arith.constant 0 : index
    %c0_0 = arith.constant 0 : index
    %0 = vector.load %arg1[%c0, %c0_0] : memref<8x256xf32, #tpu.memory_space<vmem>>, vector<8x256xf32>
    %cst = arith.constant dense<0xFF800000> : vector<8xf32>
    %1 = vector.multi_reduction <maximumf>, %0, %cst [1] : vector<8x256xf32> to vector<8xf32>
    %2 = vector.shape_cast %1 : vector<8xf32> to vector<8x1xf32>
    %cst_1 = arith.constant 0.000000e+00 : f32
    %3 = vector.broadcast %cst_1 : f32 to vector<8x1xf32>
    %4 = arith.maximumf %2, %3 : vector<8x1xf32>
    %cst_2 = arith.constant 5.500000e-01 : f32
    %5 = vector.broadcast %cst_2 : f32 to vector<8x1xf32>
    %6 = arith.mulf %4, %5 : vector<8x1xf32>
    %cst_3 = arith.constant 0.000000e+00 : f32
    %7 = vector.broadcast %cst_3 : f32 to vector<8x256xf32>
    %8 = arith.maximumf %7, %0 : vector<8x256xf32>
    %9 = vector.broadcast %6 : vector<8x1xf32> to vector<8x256xf32>
    %10 = arith.minimumf %9, %8 : vector<8x256xf32>
    %c0_4 = arith.constant 0 : index
    %c0_5 = arith.constant 0 : index
    %11 = vector.load %arg2[%c0_4, %c0_5] : memref<8x256xf32, #tpu.memory_space<vmem>>, vector<8x256xf32>
    tpu.vector_store %arg2[%c0_4, %c0_5], %10 {strides = array<i32>} : memref<8x256xf32, #tpu.memory_space<vmem>>, vector<8x256xf32>,
    return
  }
  func.func @transform_0(%arg0: i32) -> (i32, i32) {
    %c0_i32 = arith.constant 0 : i32
    %c0_i32_0 = arith.constant 0 : i32
    return %arg0, %c0_i32 : i32, i32
  }
  func.func @transform_1(%arg0: i32) -> (i32, i32) {
    %c0_i32 = arith.constant 0 : i32
    %c0_i32_0 = arith.constant 0 : i32
    return %arg0, %c0_i32 : i32, i32
  }
}

</mosaic_0001>

<llo_original>
// kernel: drs_forward.1
$region0: #{drs_forward.1}
  #allocation0 [shape = 'u32[]', space=smem, size = 0x4, offset = 0x4, fixed_abs, tag = 'smem constant byte address 0x4 - core index']
  #allocation1 [shape = 'u32[144,128]{1,0:T(1,128)}', space=vmem, size = 0x12000, scoped, tag = 'internal scratch']
  %s0 = inlined_call_operand.vmem [shape: f32[8,256], index: 0, kind: input, shape index: {}]
  %s1 = inlined_call_operand.vmem [shape: f32[8,256], index: 1, kind: output, shape index: {}]
  %s2 = sld [smem:[#allocation0]]
  $region14: #{drs_forward.1} parent=0
    _
  %s4 = ssub.s32 1, %s2
  %s5 = scalar_select 0, %s4, %s2
  // Predicated region
  $region2: #{drs_forward.1} parent=0 // pred_check
    _
  $region3: #{drs_forward.1} parent=0 // pred_check_branch
    %7 = sbr.rel (0) target = $region5
  $region4: #{drs_forward.1} parent=0 // pred_region
    _
  $region5: #{drs_forward.1} parent=0 // pred_fallthru
    _
  %v8 = vld [vmem:[%s0] sm:$0xff]
  %v9 = vld [vmem:[%s0 + $0x8] sm:$0xff]
  %v10 = vmax.f32 %v8, %v9
  %11 = vmax.xlane.f32.xlu0 %v10
  %v12 = vpop.xlane.xlu0 %11
  %v13 = vmax.f32 %v12, 0.0
  %v14 = vmul.f32 %v13, 0.55
  %v15 = vmax.f32 %v8, 0.0
  %v16 = vmax.f32 %v9, 0.0
  %v17 = vmin.f32 %v14, %v15
  %v18 = vmin.f32 %v14, %v16
  %19 = vst [vmem:[%s1] sm:$0xff] %v17
  %20 = vst [vmem:[%s1 + $0x8] sm:$0xff] %v18
  // Predicated region
  $region6: #{drs_forward.1} parent=0 // pred_check
    _
  $region7: #{drs_forward.1} parent=0 // pred_check_branch
    %22 = sbr.rel (0) target = $region9
  $region8: #{drs_forward.1} parent=0 // pred_region
    _
  $region9: #{drs_forward.1} parent=0 // pred_fallthru
    _
  // Predicated region
  $region10: #{drs_forward.1} parent=0 // pred_check
    _
  $region11: #{drs_forward.1} parent=0 // pred_check_branch
    %24 = sbr.rel (0) target = $region13
  $region12: #{drs_forward.1} parent=0 // pred_region
    _
  $region13: #{drs_forward.1} parent=0 // pred_fallthru
    _

</llo_original>
